<compile_context>
chip_gen: v6e
topology: v6e:2x2x1
jax: 0.10.0
libtpu: 0.0.40
codegen_flags: <defaults>
</compile_context>

<pallas_src>
import functools

import jax
import jax.numpy as jnp
from jax import lax
from jax.experimental import pallas as pl
from jax.experimental.pallas import tpu as pltpu

C_IN, C_OUT, K = 2, 1, 2          # ConvTranspose1d(2, 1, kernel_size=2), stride=1
LANE = 128


def conv_t_leaky_kernel(w_ref, b_ref, x_ref, o_ref, shift_ref, *,
                        n, c_in, seq_len, l_out):
    """Fused transposed conv (stride 1, K=2) + where(y>0, y, 0.12*y).

    w_ref:     SMEM (C_IN*K,) f32, natural flatten of (C_IN, 1, K):
               [w(ci0,k0), w(ci0,k1), w(ci1,k0), w(ci1,k1)]
    b_ref:     SMEM (C_OUT,) f32
    x_ref:     VMEM (n*c_in, l_pad) f32 block over the (n*c_in, seq_len) input;
               lanes >= seq_len are UNDEFINED and are masked below.
    o_ref:     VMEM (n, l_out) f32 — written exactly, no padded garbage.
    shift_ref: VMEM (n, l_pad + LANE) f32 scratch used for the 1-lane shift.
    """
    l_pad = x_ref.shape[-1]

    # Channel extraction: row layout is batch-major, i.e. row = b*c_in + ci.
    if n == 1:
        x0 = x_ref[pl.ds(0, 1), :]                    # (1, l_pad) channel 0
        x1 = x_ref[pl.ds(1, 1), :]                    # (1, l_pad) channel 1
    else:
        x0 = x_ref[pl.ds(0, n, stride=c_in), :]       # (n, l_pad) channel 0
        x1 = x_ref[pl.ds(1, n, stride=c_in), :]       # (n, l_pad) channel 1

    # In-kernel validity mask replaces any host-side zero padding: lanes past
    # the true sequence length (possibly uninitialized/NaN) never enter the
    # data path.  One cheap VPU select per channel.
    lane = lax.broadcasted_iota(jnp.int32, x0.shape, 1)
    valid = lane < seq_len
    x0 = jnp.where(valid, x0, 0.0)
    x1 = jnp.where(valid, x1, 0.0)

    # Pure-VPU taps (contraction is only 1x2 -> no MXU).  Bias folded into
    # tap0 so the final output lane (which only sees the k=1 tap) still gets it.
    tap0 = x0 * w_ref[0] + x1 * w_ref[2] + b_ref[0]   # contributes to y[:, l]
    tap1 = x0 * w_ref[1] + x1 * w_ref[3]              # contributes to y[:, l+1]

    # Shift tap1 right by one lane via scratch: two ALIGNED stores and one
    # static-offset load.  Lane 0 of the shifted view comes from the zeroed
    # half, so there is no wrap-around term at all.
    shift_ref[:, pl.ds(0, l_pad)] = jnp.zeros_like(tap1)
    shift_ref[:, pl.ds(l_pad, l_pad)] = tap1
    tap1_shifted = shift_ref[:, pl.ds(l_pad - 1, l_pad)]   # [0, tap1[0:l_pad-1]]

    y = tap0 + tap1_shifted                            # (n, l_pad)

    # x4 = where(y > 0, y, 0.12 * y); store only the real l_out lanes.
    act = jnp.where(y > 0, y, y * 0.12)
    o_ref[...] = act[:, :l_out]


def model_forward(x, weight, bias):
    """x: (N, C_IN, L) f32; weight: (C_IN, C_OUT, K) f32; bias: (C_OUT,) f32.
    Returns (N, C_OUT, L + K - 1) f32, matching the PyTorch module forward."""
    N, cin, L = x.shape
    assert cin == C_IN
    L_out = L + K - 1
    l_pad = pl.cdiv(L_out, LANE) * LANE

    # Metadata-only reshapes (no transpose, no pad, no HBM round trips).
    x2d = x.reshape(N * C_IN, L).astype(jnp.float32)
    w_flat = weight.reshape(C_IN * K).astype(jnp.float32)
    b_flat = bias.astype(jnp.float32)

    kernel = functools.partial(conv_t_leaky_kernel,
                               n=N, c_in=C_IN, seq_len=L, l_out=L_out)

    out2d = pl.pallas_call(
        kernel,
        out_shape=jax.ShapeDtypeStruct((N, L_out), jnp.float32),
        grid=(1,),
        in_specs=[
            pl.BlockSpec(memory_space=pltpu.MemorySpace.SMEM),   # 4 weights
            pl.BlockSpec(memory_space=pltpu.MemorySpace.SMEM),   # 1 bias
            pl.BlockSpec((N * C_IN, l_pad), lambda i: (0, 0)),   # lane-dense x block
        ],
        out_specs=pl.BlockSpec((N, L_out), lambda i: (0, 0)),    # direct (N, L_out)
        scratch_shapes=[pltpu.VMEM((N, l_pad + LANE), jnp.float32)],
        compiler_params=pltpu.CompilerParams(
            dimension_semantics=("arbitrary",)),
        cost_estimate=pl.CostEstimate(
            flops=10 * N * L_out,
            transcendentals=0,
            bytes_accessed=(N * C_IN * L + N * L_out) * 4),
    )(w_flat, b_flat, x2d)

    # Free reshape to the module's (N, C_OUT, L_out) output layout.
    return out2d.reshape(N, C_OUT, L_out)


def reference_forward(x, weight, bias):
    """Pure-JAX reference of ConvTranspose1d(stride=1) + leaky where."""
    N, cin, L = x.shape
    L_out = L + K - 1
    y = jnp.zeros((N, C_OUT, L_out), jnp.float32)
    for k in range(K):
        contrib = jnp.einsum("ncl,co->nol", x, weight[:, :, k])
        y = y.at[:, :, k:k + L].add(contrib)
    y = y + bias.reshape(1, C_OUT, 1)
    return jnp.where(y > 0, y, y * 0.12)


if __name__ == "__main__":
    key = jax.random.PRNGKey(0)
    kx, kw, kb = jax.random.split(key, 3)

    # Input consistent with the module: torch.randn(1, 2, 44)
    x2 = jax.random.normal(kx, (1, C_IN, 44), dtype=jnp.float32)

    # Deterministic parameter init (ConvTranspose1d weight: (C_in, C_out, K))
    bound = 1.0 / (C_IN * K) ** 0.5
    weight = jax.random.uniform(kw, (C_IN, C_OUT, K), jnp.float32, -bound, bound)
    bias = jax.random.uniform(kb, (C_OUT,), jnp.float32, -bound, bound)

    fwd = jax.jit(model_forward)
    out = jax.block_until_ready(fwd(x2, weight, bias))

    ref = reference_forward(x2, weight, bias)
    assert out.shape == (1, C_OUT, 45), out.shape
    assert jnp.allclose(out, ref, atol=1e-5, rtol=1e-5), "mismatch vs reference"

    print("KERNEL_OK")
</pallas_src>

<mosaic_0001>
module attributes {stable_mosaic.version = 11 : i64} {
  func.func @conv_t_leaky_kernel(%arg0: i32, %arg1: memref<4xf32, #tpu.memory_space<smem>>, %arg2: memref<1xf32, #tpu.memory_space<smem>>, %arg3: memref<2x128xf32, #tpu.memory_space<vmem>>, %arg4: memref<1x45xf32, #tpu.memory_space<vmem>>, %arg5: memref<1x256xf32, #tpu.memory_space<vmem>>) attributes {dimension_semantics = [#tpu.dimension_semantics<arbitrary>], iteration_bounds = array<i64: 1>, scalar_prefetch = 0 : i64, scratch_operands = 1 : i64, tpu.core_type = #tpu.core_type<tc>, window_params = [{transform_indices = @transform_0, window_bounds = array<i64: 4>}, {transform_indices = @transform_1, window_bounds = array<i64: 1>}, {transform_indices = @transform_2, window_bounds = array<i64: 2, 128>}, {pipeline_mode = #tpu.pipeline_mode<synchronous>, transform_indices = @transform_3, window_bounds = array<i64: 1, 45>}]} {
    %c0 = arith.constant 0 : index
    %c0_0 = arith.constant 0 : index
    %0 = vector.load %arg3[%c0, %c0_0] : memref<2x128xf32, #tpu.memory_space<vmem>>, vector<1x128xf32>
    %c1 = arith.constant 1 : index
    %c0_1 = arith.constant 0 : index
    %1 = vector.load %arg3[%c1, %c0_1] : memref<2x128xf32, #tpu.memory_space<vmem>>, vector<1x128xf32>
    %2 = tpu.iota {dimensions = array<i32: 1>} : vector<1x128xi32>
    %c44_i32 = arith.constant 44 : i32
    %3 = vector.broadcast %c44_i32 : i32 to vector<1x128xi32>
    %4 = arith.cmpi slt, %2, %3 : vector<1x128xi32>
    %cst = arith.constant 0.000000e+00 : f32
    %5 = vector.broadcast %cst : f32 to vector<1x128xf32>
    %6 = arith.select %4, %0, %5 : vector<1x128xi1>, vector<1x128xf32>
    %cst_2 = arith.constant 0.000000e+00 : f32
    %7 = vector.broadcast %cst_2 : f32 to vector<1x128xf32>
    %8 = arith.select %4, %1, %7 : vector<1x128xi1>, vector<1x128xf32>
    %c0_3 = arith.constant 0 : index
    %9 = memref.load %arg1[%c0_3] : memref<4xf32, #tpu.memory_space<smem>>
    %10 = vector.broadcast %9 : f32 to vector<1x128xf32>
    %11 = arith.mulf %6, %10 : vector<1x128xf32>
    %c2 = arith.constant 2 : index
    %12 = memref.load %arg1[%c2] : memref<4xf32, #tpu.memory_space<smem>>
    %13 = vector.broadcast %12 : f32 to vector<1x128xf32>
    %14 = arith.mulf %8, %13 : vector<1x128xf32>
    %15 = arith.addf %11, %14 : vector<1x128xf32>
    %c0_4 = arith.constant 0 : index
    %16 = memref.load %arg2[%c0_4] : memref<1xf32, #tpu.memory_space<smem>>
    %17 = vector.broadcast %16 : f32 to vector<1x128xf32>
    %18 = arith.addf %15, %17 : vector<1x128xf32>
    %c1_5 = arith.constant 1 : index
    %19 = memref.load %arg1[%c1_5] : memref<4xf32, #tpu.memory_space<smem>>
    %20 = vector.broadcast %19 : f32 to vector<1x128xf32>
    %21 = arith.mulf %6, %20 : vector<1x128xf32>
    %c3 = arith.constant 3 : index
    %22 = memref.load %arg1[%c3] : memref<4xf32, #tpu.memory_space<smem>>
    %23 = vector.broadcast %22 : f32 to vector<1x128xf32>
    %24 = arith.mulf %8, %23 : vector<1x128xf32>
    %25 = arith.addf %21, %24 : vector<1x128xf32>
    %cst_6 = arith.constant 0.000000e+00 : f32
    %26 = vector.broadcast %cst_6 : f32 to vector<1x128xf32>
    %c0_7 = arith.constant 0 : index
    %c0_8 = arith.constant 0 : index
    %27 = vector.load %arg5[%c0_7, %c0_8] : memref<1x256xf32, #tpu.memory_space<vmem>>, vector<1x128xf32>
    tpu.vector_store %arg5[%c0_7, %c0_8], %26 {strides = array<i32>} : memref<1x256xf32, #tpu.memory_space<vmem>>, vector<1x128xf32>,
    %c0_9 = arith.constant 0 : index
    %c128 = arith.constant 128 : index
    %28 = vector.load %arg5[%c0_9, %c128] : memref<1x256xf32, #tpu.memory_space<vmem>>, vector<1x128xf32>
    tpu.vector_store %arg5[%c0_9, %c128], %25 {strides = array<i32>} : memref<1x256xf32, #tpu.memory_space<vmem>>, vector<1x128xf32>,
    %c0_10 = arith.constant 0 : index
    %c127 = arith.constant 127 : index
    %29 = vector.load %arg5[%c0_10, %c127] : memref<1x256xf32, #tpu.memory_space<vmem>>, vector<1x128xf32>
    %30 = arith.addf %18, %29 : vector<1x128xf32>
    %cst_11 = arith.constant 0.000000e+00 : f32
    %31 = vector.broadcast %cst_11 : f32 to vector<1x128xf32>
    %32 = arith.cmpf ogt, %30, %31 : vector<1x128xf32>
    %cst_12 = arith.constant 1.200000e-01 : f32
    %33 = vector.broadcast %cst_12 : f32 to vector<1x128xf32>
    %34 = arith.mulf %30, %33 : vector<1x128xf32>
    %35 = arith.select %32, %30, %34 : vector<1x128xi1>, vector<1x128xf32>
    %36 = vector.extract_strided_slice %35 {offsets = [0, 0], sizes = [1, 45], strides = [1, 1]} : vector<1x128xf32> to vector<1x45xf32>
    %c0_13 = arith.constant 0 : index
    %c0_14 = arith.constant 0 : index
    %37 = vector.load %arg4[%c0_13, %c0_14] : memref<1x45xf32, #tpu.memory_space<vmem>>, vector<1x45xf32>
    tpu.vector_store %arg4[%c0_13, %c0_14], %36 {strides = array<i32>} : memref<1x45xf32, #tpu.memory_space<vmem>>, vector<1x45xf32>,
    return
  }
  func.func @transform_0(%arg0: i32) -> i32 {
    %c0_i32 = arith.constant 0 : i32
    %c0_i32_0 = arith.constant 0 : i32
    return %c0_i32 : i32
  }
  func.func @transform_1(%arg0: i32) -> i32 {
    %c0_i32 = arith.constant 0 : i32
    %c0_i32_0 = arith.constant 0 : i32
    return %c0_i32 : i32
  }
  func.func @transform_2(%arg0: i32) -> (i32, i32) {
    %c0_i32 = arith.constant 0 : i32
    %c0_i32_0 = arith.constant 0 : i32
    %c0_i32_1 = arith.constant 0 : i32
    return %c0_i32, %c0_i32_0 : i32, i32
  }
  func.func @transform_3(%arg0: i32) -> (i32, i32) {
    %c0_i32 = arith.constant 0 : i32
    %c0_i32_0 = arith.constant 0 : i32
    %c0_i32_1 = arith.constant 0 : i32
    return %c0_i32, %c0_i32_0 : i32, i32
  }
}

</mosaic_0001>

<llo_original>
// kernel: model_forward.1
$region0: #{model_forward.1}
  #allocation0 [shape = 'u32[]', space=smem, size = 0x4, offset = 0x4, fixed_abs, tag = 'smem constant byte address 0x4 - core index']
  #allocation1 [shape = 'u32[144,128]{1,0:T(1,128)}', space=vmem, size = 0x12000, scoped, tag = 'internal scratch']
  #allocation2 [shape = 'f32[1,256]{1,0:T(1,128)}', space=vmem, size = 0x400, scoped, tag = 'scratch operand']
  #allocation3 [shape = 'f32[1]{0:T(128)S(6)}', space=smem, size = 0x200, scoped, tag = 'scoped memory for model_forward.1']
  %s0 = inlined_call_operand.vmem [shape: f32[4], index: 0, kind: input, shape index: {}]
  %s1 = inlined_call_operand.<no memory space> [shape: f32[1], index: 1, kind: input, shape index: {}]
  %s2 = inlined_call_operand.vmem [shape: f32[2,44], index: 2, kind: input, shape index: {}]
  %s3 = inlined_call_operand.hbm [shape: f32[1,45], index: 3, kind: output, shape index: {}]
  %s4 = sld [smem:[#allocation0]]
  $region26: #{model_forward.1} parent=0
    _
  %s6 = ssub.s32 1, %s4
  %s7 = scalar_select 0, %s6, %s4
  %8 = sst [smem:[#allocation3]] %s1
  $region1: #{model_forward.1} parent=0
    #allocation4 [shape = 'u8[512]{0}', space=smem, size = 0x200, scoped, tag = 'input window, operand 0, single buffered']
    #allocation5 [shape = 's32[1]{0}', space=sflag, size = 0x4, scoped, tag = 'scoped memory for model_forward.1']
    #allocation6 [shape = 's32[1]{0}', space=sflag, size = 0x4, scoped, tag = 'scoped memory for model_forward.1']
    #allocation7 [shape = 'u8[512]{0}', space=vmem, size = 0x400, scoped, tag = 'output window, operand 0, single buffered']
    %9 = vsyncpa [#allocation6], 0
    %10 = vsyncpa [#allocation5], 0
    // Predicated region
    $region2: #{model_forward.1} parent=1 // pred_check
      _
    $region3: #{model_forward.1} parent=1 // pred_check_branch
      %12 = sbr.rel (0) target = $region5
    $region4: #{model_forward.1} parent=1 // pred_region
      %s14 = ssub.s32 16, 16
      %15 = vsyncadd [#allocation6], %s14
      %s17 = sshll.u32 %s0, 4
      %s18 = int_to_ptr.vmem [resolvable:$true] %s17
      %20 = dma.vmem_to_smem %s18, 16, [#allocation4], [#allocation6]
    $region5: #{model_forward.1} parent=1 // pred_fallthru
      _
    // Predicated region
    $region6: #{model_forward.1} parent=1 // pred_check
      _
    $region7: #{model_forward.1} parent=1 // pred_check_branch
      %22 = sbr.rel (0) target = $region9
    $region8: #{model_forward.1} parent=1 // pred_region
      _
    $region9: #{model_forward.1} parent=1 // pred_fallthru
      _
    // Predicated region
    $region10: #{model_forward.1} parent=1 // pred_check
      _
    $region11: #{model_forward.1} parent=1 // pred_check_branch
      %24 = sbr.rel (0) target = $region13
    $region12: #{model_forward.1} parent=1 // pred_region
      _
    $region13: #{model_forward.1} parent=1 // pred_fallthru
      _
    // Predicated region
    $region14: #{model_forward.1} parent=1 // pred_check
      _
    $region15: #{model_forward.1} parent=1 // pred_check_branch
      %26 = sbr.rel (0) target = $region17
    $region16: #{model_forward.1} parent=1 // pred_region
      %27 = dma.done [#allocation6], 16
    $region17: #{model_forward.1} parent=1 // pred_fallthru
      _
    %28 = sfence
    %v29 = vld [vmem:[%s2] sm:$0x1]
    %v30 = vld [vmem:[%s2 + $0x1] sm:$0x1]
    %v31 = vlaneseq
    %v32 = vand.u32 %v31, 127
    %vm33 = vcmp.lt.s32.totalorder %v32, 44
    %v34 = vsel %vm33, %v29, 0.0
    %v35 = vsel %vm33, %v30, 0.0
    %s36 = sld [smem:[#allocation4]]
    %v37 = vstv %s36
    %v38 = vmul.f32 %v34, %v37
    %s39 = sld [smem:[#allocation4 + $0x2]]
    %v40 = vstv %s39
    %v41 = vmul.f32 %v35, %v40
    %v42 = vadd.f32 %v38, %v41
    %s43 = sld [smem:[#allocation3]]
    %v44 = vstv %s43
    %v45 = vadd.f32 %v42, %v44
    %s46 = sld [smem:[#allocation4 + $0x1]]
    %v47 = vstv %s46
    %v48 = vmul.f32 %v34, %v47
    %s49 = sld [smem:[#allocation4 + $0x3]]
    %v50 = vstv %s49
    %v51 = vmul.f32 %v35, %v50
    %v52 = vadd.f32 %v48, %v51
    %v53 = vlaneseq
    %vm54 = vcmp.ge.s32.totalorder %v53, 0
    %vm55 = vcmp.lt.s32.totalorder %v53, 128
    %vm56 = vmand %vm54, %vm55
    %57 = vst.msk [vmem:[#allocation2] sm:$0x1] %vm56, 0.0
    %58 = vst.msk [vmem:[#allocation2 + $0x1] sm:$0x1] %vm56, %v52
    %v59 = vld [vmem:[#allocation2] sm:$0x3]
    %v61 = vlaneseq
    %v62 = vshrl.u32 %v61, 7
    %v63 = vsub.s32 0, %v62
    %v64 = vrot.slane %v59, %v63
    %v65 = vlaneseq
    %v66 = vshrl.u32 %v65, 7
    %v67 = vsub.s32 1, %v66
    %v68 = vrot.slane %v59, %v67
    %69 = vrot.lane.b32.xlu0 %v64, 1
    %v70 = vpop.permute.xlu0 %69
    %71 = vrot.lane.b32.xlu0 %v68, 1
    %v72 = vpop.permute.xlu0 %71
    %vm73 = vcmask 7168
    %v74 = vsel %vm73, %v70, %v72
    %v76 = vadd.f32 %v45, %v74
    %vm77 = vcmp.gt.f32.partialorder %v76, 0.0
    %v78 = vmul.f32 %v76, 0.12
    %v79 = vsel %vm77, %v76, %v78
    %vm80 = vcmask 360448
    %81 = vst.msk [vmem:[#allocation7] sm:$0x1] %vm80, %v79
    // Predicated region
    $region18: #{model_forward.1} parent=1 // pred_check
      _
    $region19: #{model_forward.1} parent=1 // pred_check_branch
      %83 = sbr.rel (0) target = $region21
    $region20: #{model_forward.1} parent=1 // pred_region
      %s85 = ssub.s32 16, 16
      %86 = vsyncadd [#allocation5], %s85
      %s88 = sshll.u32 [#allocation7], 4
      %s89 = int_to_ptr.vmem [resolvable:$true] %s88
      %91 = dma.vmem_to_hbm [thread:$0]  %s89, 16, %s3, [#allocation5]
    $region21: #{model_forward.1} parent=1 // pred_fallthru
      _
    // Predicated region
    $region22: #{model_forward.1} parent=1 // pred_check
      _
    $region23: #{model_forward.1} parent=1 // pred_check_branch
      %93 = sbr.rel (0) target = $region25
    $region24: #{model_forward.1} parent=1 // pred_region
      %94 = dma.done [#allocation5], 16
    $region25: #{model_forward.1} parent=1 // pred_fallthru
      _
    %95 = vsyncpa [#allocation5], 1
    %96 = vsyncpa [#allocation6], 1

</llo_original>
